<compile_context>
chip_gen: v7x
topology: tpu7x:2x2x1
jax: 0.10.0
libtpu: 0.0.40
codegen_flags: <defaults>
</compile_context>

<pallas_src>
import functools

import jax
import jax.numpy as jnp
from jax import lax
from jax.experimental import pallas as pl
from jax.experimental.pallas import tpu as pltpu


# ----------------------------------------------------------------------------
# Kernel: fused conv(KxK, pad) + folded-BN + ReLU for Nb batch elements
# ----------------------------------------------------------------------------
def outconv_kernel(x_ref, wT_ref, scale_ref, bias_ref, o_ref, xpad_ref, *, pad):
    """
    x_ref:     (Nb, H, W*Cin)            input rows, width*channels on lanes
    wT_ref:    (K*W*Cin, Wout*Cout)      block-Toeplitz conv weights, the K
                                         dy-taps stacked along the contraction
                                         dim (width padding folded in)
    scale_ref: (1, Wout*Cout)            folded BN scale, tiled over Wout
    bias_ref:  (1, Wout*Cout)            folded BN bias,  tiled over Wout
    o_ref:     (Nb, Hout, Wout*Cout)     output (lane-dense last dim)
    xpad_ref:  (Nb, Hp_al, W*Cin) f32    VMEM scratch, H-padded copy of x
                                         (Hp_al = H + 2*pad rounded up to 8)
    """
    Nb, H, WCin = x_ref.shape
    _, Hout, WoCout = o_ref.shape
    K = wT_ref.shape[0] // WCin

    # In-kernel H-halo handling: zero ONLY the 2*pad halo rows (the interior
    # rows are fully overwritten just below).  Done every grid step — NOT
    # hoisted under pl.when(program_id == 0) — so that with "parallel"
    # megacore sharding each core initialises its own scratch.
    if pad > 0:
        zhalo = jnp.zeros((Nb, pad, WCin), xpad_ref.dtype)
        xpad_ref[:, 0:pad, :] = zhalo                       # top halo
        xpad_ref[:, pad + H:pad + H + pad, :] = zhalo       # bottom halo
    # Interior rows (sublane offset `pad` is inherent to the conv halo).
    xpad_ref[:, pad:pad + H, :] = x_ref[...].astype(xpad_ref.dtype)

    # Single deep matmul: M = Nb*Hout, contraction = K*W*Cin, N = Wout*Cout.
    # The K row-shifted windows of the padded image are concatenated on the
    # lane axis so one MXU pass does the whole conv row.
    parts = [
        xpad_ref[:, dy:dy + Hout, :].reshape(Nb * Hout, WCin) for dy in range(K)
    ]
    lhs = jnp.concatenate(parts, axis=-1)                   # (Nb*Hout, K*W*Cin)
    acc = jnp.dot(lhs, wT_ref[...], preferred_element_type=jnp.float32)

    # Fused BatchNorm (eval-mode, folded) + ReLU, full-width VPU ops.
    y = acc * scale_ref[...] + bias_ref[...]
    o_ref[...] = jnp.maximum(y, 0.0).reshape(Nb, Hout, WoCout).astype(o_ref.dtype)


# ----------------------------------------------------------------------------
# Wrapper glue: layout, BN folding, Toeplitz weight expansion
# ----------------------------------------------------------------------------
def fold_bn(conv_bias, gamma, beta, mean, var, eps=1e-5):
    scale = gamma / jnp.sqrt(var + eps)
    bias = beta + (conv_bias - mean) * scale
    return scale, bias


def build_width_toeplitz(w_hwio, w_in, w_out, pad):
    """Expand HWIO conv weights into per-dy block-Toeplitz matrices.

    Assumes stride=1, dilation=1 (as in the nn.Conv2d used by the module).
    Returns T of shape (K, w_in*Cin, w_out*Cout) such that
      T[dy, win*Cin + ci, w*Cout + co] = w_hwio[dy, win - w + pad, ci, co]
    when 0 <= win - w + pad < Kw and 0 otherwise (implicit zero-padding in W).
    """
    K, Kw, Cin, Cout = w_hwio.shape
    win = jnp.arange(w_in)
    wo = jnp.arange(w_out)
    dx = win[:, None] - wo[None, :] + pad                 # (w_in, w_out)
    valid = (dx >= 0) & (dx < Kw)
    dxc = jnp.clip(dx, 0, Kw - 1)
    T = w_hwio[:, dxc]                                    # (K, w_in, w_out, Cin, Cout)
    T = jnp.where(valid[None, :, :, None, None], T, 0.0)
    T = jnp.transpose(T, (0, 1, 3, 2, 4))                 # (K, w_in, Cin, w_out, Cout)
    return T.reshape(K, w_in * Cin, w_out * Cout)


def _round_up(x, m):
    return ((x + m - 1) // m) * m


def _choose_batch_block(n):
    """Largest divisor of n that still leaves >= 2 grid steps (v7x has 2 TCs)."""
    if n <= 1:
        return 1
    for nb in range(n // 2, 0, -1):
        if n % nb == 0:
            return nb
    return 1


def _vmem_limit_bytes():
    """Derive a scoped-VMEM limit from the actual chip (v7x: 64 MiB total)."""
    try:
        cap = int(pltpu.get_tpu_info().vmem_capacity_bytes)
    except Exception:
        cap = 64 * 1024 * 1024
    return max(16 * 1024 * 1024, min(cap // 2, 64 * 1024 * 1024))


@functools.partial(jax.jit, static_argnames=("kernel_size", "padding"))
def outconv_forward(x_nchw, params, *, kernel_size=3, padding=1):
    """Pallas implementation of outconv.forward (eval-mode BatchNorm)."""
    N, Cin, H, W = x_nchw.shape
    K, pad = kernel_size, padding
    w_hwio = params["w"]                                  # (K, K, Cin, Cout)
    Cout = w_hwio.shape[-1]
    Hout = H + 2 * pad - K + 1
    Wout = W + 2 * pad - K + 1
    Hp_al = _round_up(H + 2 * pad, 8)                     # sublane-aligned scratch

    scale, bias = fold_bn(params["b"], params["gamma"], params["beta"],
                          params["mean"], params["var"])
    # (K, W*Cin, Wout*Cout) -> single (K*W*Cin, Wout*Cout) slab: the K taps
    # are stacked along the contraction dim for the one-matmul kernel.
    wT = build_width_toeplitz(w_hwio, W, Wout, pad).reshape(
        K * W * Cin, Wout * Cout)
    scale_wc = jnp.tile(scale, Wout).reshape(1, Wout * Cout)
    bias_wc = jnp.tile(bias, Wout).reshape(1, Wout * Cout)

    # NCHW -> NHWC -> (N, H, W*Cin): width*channels folded onto the lane axis.
    x_flat = jnp.transpose(x_nchw, (0, 2, 3, 1)).reshape(N, H, W * Cin)

    # Fold Nb images into the matmul M-dim; keep >= 2 grid steps for v7x.
    Nb = _choose_batch_block(N)
    steps = N // Nb

    kernel = functools.partial(outconv_kernel, pad=pad)

    out = pl.pallas_call(
        kernel,
        out_shape=jax.ShapeDtypeStruct((N, Hout, Wout * Cout), x_nchw.dtype),
        grid=(steps,),
        in_specs=[
            pl.BlockSpec((Nb, H, W * Cin), lambda g: (g, 0, 0)),
            pl.BlockSpec((K * W * Cin, Wout * Cout), lambda g: (0, 0)),
            pl.BlockSpec((1, Wout * Cout), lambda g: (0, 0)),
            pl.BlockSpec((1, Wout * Cout), lambda g: (0, 0)),
        ],
        out_specs=pl.BlockSpec((Nb, Hout, Wout * Cout), lambda g: (g, 0, 0)),
        scratch_shapes=[pltpu.VMEM((Nb, Hp_al, W * Cin), jnp.float32)],
        compiler_params=pltpu.CompilerParams(
            dimension_semantics=("parallel",),
            vmem_limit_bytes=_vmem_limit_bytes(),
        ),
    )(x_flat, wT, scale_wc, bias_wc)

    # (N, Hout, Wout*Cout) -> NCHW (reshape is metadata-only, one transpose)
    out = out.reshape(N, Hout, Wout, Cout)
    return jnp.transpose(out, (0, 3, 1, 2))


# ----------------------------------------------------------------------------
# Pure-JAX reference (same math) for the correctness check
# ----------------------------------------------------------------------------
def outconv_forward_ref(x_nchw, params, padding=1, eps=1e-5):
    x = jnp.transpose(x_nchw, (0, 2, 3, 1))               # NHWC
    y = lax.conv_general_dilated(
        x, params["w"], window_strides=(1, 1),
        padding=[(padding, padding), (padding, padding)],
        dimension_numbers=("NHWC", "HWIO", "NHWC"),
        precision=lax.Precision.HIGHEST) + params["b"]
    y = (y - params["mean"]) / jnp.sqrt(params["var"] + eps) \
        * params["gamma"] + params["beta"]
    y = jnp.maximum(y, 0.0)
    return jnp.transpose(y, (0, 3, 1, 2))


# ----------------------------------------------------------------------------
# Deterministic synthetic parameters (shapes from nn.Module __init__)
# ----------------------------------------------------------------------------
def init_params(key, inC, outC, K):
    k1, k2, k3, k4, k5, k6 = jax.random.split(key, 6)
    return {
        "w": 0.1 * jax.random.normal(k1, (K, K, inC, outC), jnp.float32),
        "b": 0.1 * jax.random.normal(k2, (outC,), jnp.float32),
        "gamma": 1.0 + 0.1 * jax.random.normal(k3, (outC,), jnp.float32),
        "beta": 0.1 * jax.random.normal(k4, (outC,), jnp.float32),
        "mean": 0.1 * jax.random.normal(k5, (outC,), jnp.float32),
        "var": jax.random.uniform(k6, (outC,), jnp.float32, 0.5, 1.5),
    }


if __name__ == "__main__":
    key = jax.random.PRNGKey(0)
    kx, kp, kx2 = jax.random.split(key, 3)

    # outconv(inC=4, outC=8, kernel_size=3, padding=1, momentum=0.1)
    N, inC, outC, H, W = 2, 4, 8, 16, 16
    K, pad = 3, 1

    params = init_params(kp, inC, outC, K)

    # N=2 -> Nb=1, 2 grid steps (keeps both v7x TensorCores busy).
    x2 = jax.random.normal(kx, (N, inC, H, W), jnp.float32)   # NCHW like PyTorch
    out2 = jax.block_until_ready(outconv_forward(x2, params, kernel_size=K, padding=pad))
    ref2 = outconv_forward_ref(x2, params, padding=pad)
    assert out2.shape == (N, outC, H, W), out2.shape
    assert jnp.allclose(out2, ref2, atol=1e-4, rtol=1e-4), \
        float(jnp.max(jnp.abs(out2 - ref2)))

    # N=4 -> Nb=2: exercises batch folding into the matmul M-dim per grid step.
    x4 = jax.random.normal(kx2, (4, inC, H, W), jnp.float32)
    out4 = jax.block_until_ready(outconv_forward(x4, params, kernel_size=K, padding=pad))
    ref4 = outconv_forward_ref(x4, params, padding=pad)
    assert out4.shape == (4, outC, H, W), out4.shape
    assert jnp.allclose(out4, ref4, atol=1e-4, rtol=1e-4), \
        float(jnp.max(jnp.abs(out4 - ref4)))

    print("KERNEL_OK")
</pallas_src>

<mosaic_0001>
module attributes {stable_mosaic.version = 11 : i64} {
  func.func @outconv_kernel(%arg0: i32, %arg1: memref<1x16x64xf32, #tpu.memory_space<vmem>>, %arg2: memref<192x128xf32, #tpu.memory_space<vmem>>, %arg3: memref<1x128xf32, #tpu.memory_space<vmem>>, %arg4: memref<1x128xf32, #tpu.memory_space<vmem>>, %arg5: memref<1x16x128xf32, #tpu.memory_space<vmem>>, %arg6: memref<1x24x64xf32, #tpu.memory_space<vmem>>) attributes {dimension_semantics = [#tpu.dimension_semantics<parallel>], iteration_bounds = array<i64: 2>, scalar_prefetch = 0 : i64, scratch_operands = 1 : i64, tpu.core_type = #tpu.core_type<tc>, window_params = [{transform_indices = @transform_0, window_bounds = array<i64: 1, 16, 64>}, {pipeline_mode = #tpu.pipeline_mode<synchronous>, transform_indices = @transform_1, window_bounds = array<i64: 192, 128>}, {pipeline_mode = #tpu.pipeline_mode<synchronous>, transform_indices = @transform_2, window_bounds = array<i64: 1, 128>}, {pipeline_mode = #tpu.pipeline_mode<synchronous>, transform_indices = @transform_3, window_bounds = array<i64: 1, 128>}, {transform_indices = @transform_4, window_bounds = array<i64: 1, 16, 128>}]} {
    %cst = arith.constant 0.000000e+00 : f32
    %0 = vector.broadcast %cst : f32 to vector<1x1x64xf32>
    %c0 = arith.constant 0 : index
    %c0_0 = arith.constant 0 : index
    %c0_1 = arith.constant 0 : index
    %1 = vector.load %arg6[%c0, %c0_0, %c0_1] : memref<1x24x64xf32, #tpu.memory_space<vmem>>, vector<1x1x64xf32>
    tpu.vector_store %arg6[%c0, %c0_0, %c0_1], %0 {strides = array<i32>} : memref<1x24x64xf32, #tpu.memory_space<vmem>>, vector<1x1x64xf32>,
    %c0_2 = arith.constant 0 : index
    %c17 = arith.constant 17 : index
    %c0_3 = arith.constant 0 : index
    %2 = vector.load %arg6[%c0_2, %c17, %c0_3] : memref<1x24x64xf32, #tpu.memory_space<vmem>>, vector<1x1x64xf32>
    tpu.vector_store %arg6[%c0_2, %c17, %c0_3], %0 {strides = array<i32>} : memref<1x24x64xf32, #tpu.memory_space<vmem>>, vector<1x1x64xf32>,
    %c0_4 = arith.constant 0 : index
    %c0_5 = arith.constant 0 : index
    %c0_6 = arith.constant 0 : index
    %3 = vector.load %arg1[%c0_4, %c0_5, %c0_6] : memref<1x16x64xf32, #tpu.memory_space<vmem>>, vector<1x16x64xf32>
    %c0_7 = arith.constant 0 : index
    %c1 = arith.constant 1 : index
    %c0_8 = arith.constant 0 : index
    %4 = vector.load %arg6[%c0_7, %c1, %c0_8] : memref<1x24x64xf32, #tpu.memory_space<vmem>>, vector<1x16x64xf32>
    tpu.vector_store %arg6[%c0_7, %c1, %c0_8], %3 {strides = array<i32>} : memref<1x24x64xf32, #tpu.memory_space<vmem>>, vector<1x16x64xf32>,
    %c0_9 = arith.constant 0 : index
    %c0_10 = arith.constant 0 : index
    %c0_11 = arith.constant 0 : index
    %5 = vector.load %arg6[%c0_9, %c0_10, %c0_11] : memref<1x24x64xf32, #tpu.memory_space<vmem>>, vector<1x16x64xf32>
    %6 = vector.shape_cast %5 : vector<1x16x64xf32> to vector<16x64xf32>
    %c0_12 = arith.constant 0 : index
    %c1_13 = arith.constant 1 : index
    %c0_14 = arith.constant 0 : index
    %7 = vector.load %arg6[%c0_12, %c1_13, %c0_14] : memref<1x24x64xf32, #tpu.memory_space<vmem>>, vector<1x16x64xf32>
    %8 = vector.shape_cast %7 : vector<1x16x64xf32> to vector<16x64xf32>
    %c0_15 = arith.constant 0 : index
    %c2 = arith.constant 2 : index
    %c0_16 = arith.constant 0 : index
    %9 = vector.load %arg6[%c0_15, %c2, %c0_16] : memref<1x24x64xf32, #tpu.memory_space<vmem>>, vector<1x16x64xf32>
    %10 = vector.shape_cast %9 : vector<1x16x64xf32> to vector<16x64xf32>
    %11 = tpu.concatenate %6, %8, %10 in 1 : vector<16x64xf32>, vector<16x64xf32>, vector<16x64xf32> -> vector<16x192xf32>
    %c0_17 = arith.constant 0 : index
    %c0_18 = arith.constant 0 : index
    %12 = vector.load %arg2[%c0_17, %c0_18] : memref<192x128xf32, #tpu.memory_space<vmem>>, vector<192x128xf32>
    %cst_19 = arith.constant dense<0.000000e+00> : vector<16x128xf32>
    %13 = tpu.matmul %11, %12, %cst_19 {dimension_numbers = #tpu.dot_dimension_numbers<[1], [0], [0], [1], [0, 0, 1, 1], [], []>} : vector<16x192xf32>, vector<192x128xf32>, vector<16x128xf32> -> vector<16x128xf32>
    %c0_20 = arith.constant 0 : index
    %c0_21 = arith.constant 0 : index
    %14 = vector.load %arg3[%c0_20, %c0_21] : memref<1x128xf32, #tpu.memory_space<vmem>>, vector<1x128xf32>
    %15 = vector.broadcast %14 : vector<1x128xf32> to vector<16x128xf32>
    %16 = arith.mulf %13, %15 : vector<16x128xf32>
    %c0_22 = arith.constant 0 : index
    %c0_23 = arith.constant 0 : index
    %17 = vector.load %arg4[%c0_22, %c0_23] : memref<1x128xf32, #tpu.memory_space<vmem>>, vector<1x128xf32>
    %18 = vector.broadcast %17 : vector<1x128xf32> to vector<16x128xf32>
    %19 = arith.addf %16, %18 : vector<16x128xf32>
    %cst_24 = arith.constant 0.000000e+00 : f32
    %20 = vector.broadcast %cst_24 : f32 to vector<16x128xf32>
    %21 = arith.maximumf %19, %20 : vector<16x128xf32>
    %22 = vector.shape_cast %21 : vector<16x128xf32> to vector<1x16x128xf32>
    %c0_25 = arith.constant 0 : index
    %c0_26 = arith.constant 0 : index
    %c0_27 = arith.constant 0 : index
    %23 = vector.load %arg5[%c0_25, %c0_26, %c0_27] : memref<1x16x128xf32, #tpu.memory_space<vmem>>, vector<1x16x128xf32>
    tpu.vector_store %arg5[%c0_25, %c0_26, %c0_27], %22 {strides = array<i32>} : memref<1x16x128xf32, #tpu.memory_space<vmem>>, vector<1x16x128xf32>,
    return
  }
  func.func @transform_0(%arg0: i32) -> (i32, i32, i32) {
    %c0_i32 = arith.constant 0 : i32
    %c0_i32_0 = arith.constant 0 : i32
    %c0_i32_1 = arith.constant 0 : i32
    return %arg0, %c0_i32, %c0_i32_0 : i32, i32, i32
  }
  func.func @transform_1(%arg0: i32) -> (i32, i32) {
    %c0_i32 = arith.constant 0 : i32
    %c0_i32_0 = arith.constant 0 : i32
    %c0_i32_1 = arith.constant 0 : i32
    return %c0_i32, %c0_i32_0 : i32, i32
  }
  func.func @transform_2(%arg0: i32) -> (i32, i32) {
    %c0_i32 = arith.constant 0 : i32
    %c0_i32_0 = arith.constant 0 : i32
    %c0_i32_1 = arith.constant 0 : i32
    return %c0_i32, %c0_i32_0 : i32, i32
  }
  func.func @transform_3(%arg0: i32) -> (i32, i32) {
    %c0_i32 = arith.constant 0 : i32
    %c0_i32_0 = arith.constant 0 : i32
    %c0_i32_1 = arith.constant 0 : i32
    return %c0_i32, %c0_i32_0 : i32, i32
  }
  func.func @transform_4(%arg0: i32) -> (i32, i32, i32) {
    %c0_i32 = arith.constant 0 : i32
    %c0_i32_0 = arith.constant 0 : i32
    %c0_i32_1 = arith.constant 0 : i32
    return %arg0, %c0_i32, %c0_i32_0 : i32, i32, i32
  }
}

</mosaic_0001>

<llo_original>
// kernel: tile.13
$region0: #{tile.13}
  #allocation0 [shape = 's32[1]{0}', space=sflag, size = 0x4, scoped, tag = 'scoped memory for tile.13']
  %s0 = inlined_call_operand.vmem [shape: f32[8], index: 0, kind: input, shape index: {}]
  %s1 = inlined_call_operand.vmem [shape: f32[16,8], index: 1, kind: output, shape index: {}]
  // Predicated region
  $region2: #{tile.13} parent=0 // pred_check
    _
  $region3: #{tile.13} parent=0 // pred_check_branch
    %3 = sbr.rel (0) target = $region5
  $region4: #{tile.13} parent=0 // pred_region
    _
  $region5: #{tile.13} parent=0 // pred_fallthru
    _
  %v4 = vld [vmem:[%s0] ss:$0 sm:$0xff]
  %5 = vst [vmem:[%s1] sm:$0xff] %v4
  %s6 = scalar_lea.vmem %s1, 8
  %7 = vst [vmem:[%s6] sm:$0xff] %v4

// kernel: tile.14
$region0: #{tile.14}
  %s0 = inlined_call_operand.vmem [shape: f32[16,8], index: 0, kind: input, shape index: {}]
  %s1 = inlined_call_operand.vmem [shape: f32[1,128], index: 1, kind: output, shape index: {}]
  $region1: #{tile.14} parent=0
    #allocation0 [shape = 'u8[4096]{0}', space=vmem, size = 0x1000, scoped, tag = 'scoped mem for output reshape']
    %v2 = vld [vmem:[%s0] sm:$0x1]
    %vm3 = vcmask 64512
    %4 = vst.msk [vmem:[#allocation0] sm:$0x1] %vm3, %v2
    %s5 = scalar_lea.vmem %s0, 15
    %v6 = vld [vmem:[%s5] sm:$0x1]
    %7 = vrot.lane.b32.xlu0 %v6, 120
    %v8 = vpop.permute.xlu0 %7
    %vm9 = vcmask 1048512
    %10 = vst.msk [vmem:[#allocation0] sm:$0x1] %vm9, %v8
    %s11 = scalar_lea.vmem %s0, 14
    %v12 = vld [vmem:[%s11] sm:$0x1]
    %13 = vrot.lane.b32.xlu0 %v12, 112
    %v14 = vpop.permute.xlu0 %13
    %vm15 = vcmask 982912
    %16 = vst.msk [vmem:[#allocation0] sm:$0x1] %vm15, %v14
    %s17 = scalar_lea.vmem %s0, 13
    %v18 = vld [vmem:[%s17] sm:$0x1]
    %19 = vrot.lane.b32.xlu0 %v18, 104
    %v20 = vpop.permute.xlu0 %19
    %vm21 = vcmask 917312
    %22 = vst.msk [vmem:[#allocation0] sm:$0x1] %vm21, %v20
    %s23 = scalar_lea.vmem %s0, 12
    %v24 = vld [vmem:[%s23] sm:$0x1]
    %25 = vrot.lane.b32.xlu0 %v24, 96
    %v26 = vpop.permute.xlu0 %25
    %vm27 = vcmask 851712
    %28 = vst.msk [vmem:[#allocation0] sm:$0x1] %vm27, %v26
    %s29 = scalar_lea.vmem %s0, 11
    %v30 = vld [vmem:[%s29] sm:$0x1]
    %31 = vrot.lane.b32.xlu0 %v30, 88
    %v32 = vpop.permute.xlu0 %31
    %vm33 = vcmask 786112
    %34 = vst.msk [vmem:[#allocation0] sm:$0x1] %vm33, %v32
    %s35 = scalar_lea.vmem %s0, 10
    %v36 = vld [vmem:[%s35] sm:$0x1]
    %37 = vrot.lane.b32.xlu0 %v36, 80
    %v38 = vpop.permute.xlu0 %37
    %vm39 = vcmask 720512
    %40 = vst.msk [vmem:[#allocation0] sm:$0x1] %vm39, %v38
    %s41 = scalar_lea.vmem %s0, 9
    %v42 = vld [vmem:[%s41] sm:$0x1]
    %43 = vrot.lane.b32.xlu0 %v42, 72
    %v44 = vpop.permute.xlu0 %43
    %vm45 = vcmask 654912
    %46 = vst.msk [vmem:[#allocation0] sm:$0x1] %vm45, %v44
    %s47 = scalar_lea.vmem %s0, 8
    %v48 = vld [vmem:[%s47] sm:$0x1]
    %49 = vrot.lane.b32.xlu0 %v48, 64
    %v50 = vpop.permute.xlu0 %49
    %vm51 = vcmask 589312
    %52 = vst.msk [vmem:[#allocation0] sm:$0x1] %vm51, %v50
    %s53 = scalar_lea.vmem %s0, 7
    %v54 = vld [vmem:[%s53] sm:$0x1]
    %55 = vrot.lane.b32.xlu0 %v54, 56
    %v56 = vpop.permute.xlu0 %55
    %vm57 = vcmask 523712
    %58 = vst.msk [vmem:[#allocation0] sm:$0x1] %vm57, %v56
    %s59 = scalar_lea.vmem %s0, 6
    %v60 = vld [vmem:[%s59] sm:$0x1]
    %61 = vrot.lane.b32.xlu0 %v60, 48
    %v62 = vpop.permute.xlu0 %61
    %vm63 = vcmask 458112
    %64 = vst.msk [vmem:[#allocation0] sm:$0x1] %vm63, %v62
    %s65 = scalar_lea.vmem %s0, 5
    %v66 = vld [vmem:[%s65] sm:$0x1]
    %67 = vrot.lane.b32.xlu0 %v66, 40
    %v68 = vpop.permute.xlu0 %67
    %vm69 = vcmask 392512
    %70 = vst.msk [vmem:[#allocation0] sm:$0x1] %vm69, %v68
    %s71 = scalar_lea.vmem %s0, 4
    %v72 = vld [vmem:[%s71] sm:$0x1]
    %73 = vrot.lane.b32.xlu0 %v72, 32
    %v74 = vpop.permute.xlu0 %73
    %vm75 = vcmask 326912
    %76 = vst.msk [vmem:[#allocation0] sm:$0x1] %vm75, %v74
    %s77 = scalar_lea.vmem %s0, 3
    %v78 = vld [vmem:[%s77] sm:$0x1]
    %79 = vrot.lane.b32.xlu0 %v78, 24
    %v80 = vpop.permute.xlu0 %79
    %vm81 = vcmask 261312
    %82 = vst.msk [vmem:[#allocation0] sm:$0x1] %vm81, %v80
    %s83 = scalar_lea.vmem %s0, 2
    %v84 = vld [vmem:[%s83] sm:$0x1]
    %85 = vrot.lane.b32.xlu0 %v84, 16
    %v86 = vpop.permute.xlu0 %85
    %vm87 = vcmask 195712
    %88 = vst.msk [vmem:[#allocation0] sm:$0x1] %vm87, %v86
    %s89 = scalar_lea.vmem %s0, 1
    %v90 = vld [vmem:[%s89] sm:$0x1]
    %91 = vrot.lane.b32.xlu0 %v90, 8
    %v92 = vpop.permute.xlu0 %91
    %vm93 = vcmask 130112
    %94 = vst.msk [vmem:[#allocation0] sm:$0x1] %vm93, %v92
    %s96 = sshllo.u32 0, 1
    %v98 = vld [vmem:[#allocation0] sm:%s96]
    %s99 = sshllo.u32 0, 1
    %100 = vst [vmem:[%s1] sm:%s99] %v98

// kernel: outconv_forward.1
$region0: #{outconv_forward.1}
  #allocation0 [shape = 'u32[]', space=smem, size = 0x4, offset = 0x4, fixed_abs, tag = 'smem constant byte address 0x4 - core index']
  #allocation1 [shape = 'u32[144,128]{1,0:T(1,128)}', space=vmem, size = 0x12000, scoped, tag = 'internal scratch']
  #allocation2 [shape = 'f32[1,24,64]{2,1,0:T(8,128)}', space=vmem, size = 0x3000, scoped, tag = 'scratch operand']
  %s0 = inlined_call_operand.vmem [shape: f32[2,16,64], index: 0, kind: input, shape index: {}]
  %s1 = inlined_call_operand.vmem [shape: f32[192,128], index: 1, kind: input, shape index: {}]
  %s2 = inlined_call_operand.vmem [shape: f32[1,128], index: 2, kind: input, shape index: {}]
  %s3 = inlined_call_operand.vmem [shape: f32[1,128], index: 3, kind: input, shape index: {}]
  %s4 = inlined_call_operand.vmem [shape: f32[2,16,128], index: 4, kind: output, shape index: {}]
  %s5 = sld [smem:[#allocation0]]
  $region49: #{outconv_forward.1} parent=0
    _
  %s7 = ssub.s32 1, %s5
  %s8 = scalar_select 0, %s7, %s5
  loop: start=0, step=1, limit=4
  $region2: #{outconv_forward.1} parent=0 // loop_pre_header
    _
  $region3: #{outconv_forward.1} parent=0 // loop_header
    %s10 = sphi 0, %s14
    %p11 = scmp.ge.s32.totalorder %s10, 4
    %s20 = sphi 0, %s22
    %s23 = sphi 0, %s20
    %s24 = sphi 0, %s23
    %s40 = sphi 0, %s24
    %s44 = sphi 0, %s44
    %s46 = sphi 0, %s44
    %s47 = sphi 0, %s46
    %s61 = sphi 0, %s47
    %s65 = sphi 0, %s65
    %s67 = sphi 0, %s65
    %s68 = sphi 0, %s67
    %s82 = sphi 0, %s68
    %s86 = sphi 0, %s86
    %s88 = sphi 0, %s86
    %s89 = sphi 0, %s88
    %s103 = sphi 0, %s89
    %s109 = sphi 0, %s111
    %s112 = sphi 0, %s109
    %s113 = sphi 0, %s112
    %s129 = sphi 0, %s113
  $region4: #{outconv_forward.1} parent=0 // loop_header_branch
    %13 = sbr.rel (%p11) target = $region8
  $region5: #{outconv_forward.1} parent=0 // loop_body
    %s15 = ssub.s32 %s10, 1
    %s16 = ssub.s32 %s10, 2
    %s17 = sadd.s32 %s10, 1
    %s18 = ssub.s32 %s10, %s17
    %p19 = scmp.eq.s32.totalorder %s18, 0
    %s21 = sadd.s32 %s20, 1
    %s22 = scalar_select %p19, %s20, %s21
    %p25 = pneg %p19
    %p26 = scmp.eq.s32.totalorder %s10, 1
    %p27 = por %p25, %p26
    %p28 = scmp.ne.s32.totalorder %s20, %s23
    %p29 = scmp.eq.s32.totalorder %s10, 0
    %p30 = por %p28, %p29
    %p31 = scmp.ne.s32.totalorder %s20, %s23
    %p32 = scmp.eq.s32.totalorder %s15, 1
    %p33 = por %p31, %p32
    %p34 = scmp.ne.s32.totalorder %s23, %s24
    %p35 = scmp.eq.s32.totalorder %s15, 0
    %p36 = por %p34, %p35
    %p37 = scmp.ne.s32.totalorder %s23, %s24
    %p38 = scmp.eq.s32.totalorder %s16, 1
    %p39 = por %p37, %p38
    %p41 = scmp.ne.s32.totalorder %s24, %s40
    %p42 = scmp.eq.s32.totalorder %s16, 0
    %p43 = por %p41, %p42
    %s45 = sadd.s32 %s44, 1
    %p48 = scmp.eq.s32.totalorder %s10, 1
    %p49 = scmp.ne.s32.totalorder %s44, %s46
    %p50 = scmp.eq.s32.totalorder %s10, 0
    %p51 = por %p49, %p50
    %p52 = scmp.ne.s32.totalorder %s44, %s46
    %p53 = scmp.eq.s32.totalorder %s15, 1
    %p54 = por %p52, %p53
    %p55 = scmp.ne.s32.totalorder %s46, %s47
    %p56 = scmp.eq.s32.totalorder %s15, 0
    %p57 = por %p55, %p56
    %p58 = scmp.ne.s32.totalorder %s46, %s47
    %p59 = scmp.eq.s32.totalorder %s16, 1
    %p60 = por %p58, %p59
    %p62 = scmp.ne.s32.totalorder %s47, %s61
    %p63 = scmp.eq.s32.totalorder %s16, 0
    %p64 = por %p62, %p63
    %s66 = sadd.s32 %s65, 1
    %p69 = scmp.eq.s32.totalorder %s10, 1
    %p70 = scmp.ne.s32.totalorder %s65, %s67
    %p71 = scmp.eq.s32.totalorder %s10, 0
    %p72 = por %p70, %p71
    %p73 = scmp.ne.s32.totalorder %s65, %s67
    %p74 = scmp.eq.s32.totalorder %s15, 1
    %p75 = por %p73, %p74
    %p76 = scmp.ne.s32.totalorder %s67, %s68
    %p77 = scmp.eq.s32.totalorder %s15, 0
    %p78 = por %p76, %p77
    %p79 = scmp.ne.s32.totalorder %s67, %s68
    %p80 = scmp.eq.s32.totalorder %s16, 1
    %p81 = por %p79, %p80
    %p83 = scmp.ne.s32.totalorder %s68, %s82
    %p84 = scmp.eq.s32.totalorder %s16, 0
    %p85 = por %p83, %p84
    %s87 = sadd.s32 %s86, 1
    %p90 = scmp.eq.s32.totalorder %s10, 1
    %p91 = scmp.ne.s32.totalorder %s86, %s88
    %p92 = scmp.eq.s32.totalorder %s10, 0
    %p93 = por %p91, %p92
    %p94 = scmp.ne.s32.totalorder %s86, %s88
    %p95 = scmp.eq.s32.totalorder %s15, 1
    %p96 = por %p94, %p95
    %p97 = scmp.ne.s32.totalorder %s88, %s89
    %p98 = scmp.eq.s32.totalorder %s15, 0
    %p99 = por %p97, %p98
    %p100 = scmp.ne.s32.totalorder %s88, %s89
    %p101 = scmp.eq.s32.totalorder %s16, 1
    %p102 = por %p100, %p101
    %p104 = scmp.ne.s32.totalorder %s89, %s103
    %p105 = scmp.eq.s32.totalorder %s16, 0
    %p106 = por %p104, %p105
    %s107 = ssub.s32 %s10, %s17
    %p108 = scmp.eq.s32.totalorder %s107, 0
    %s110 = sadd.s32 %s109, 1
    %s111 = scalar_select %p108, %s109, %s110
    %p114 = pneg %p108
    %p115 = scmp.eq.s32.totalorder %s10, 1
    %p116 = por %p114, %p115
    %p117 = scmp.ne.s32.totalorder %s109, %s112
    %p118 = scmp.eq.s32.totalorder %s10, 0
    %p119 = por %p117, %p118
    %p120 = scmp.ne.s32.totalorder %s109, %s112
    %p121 = scmp.eq.s32.totalorder %s15, 1
    %p122 = por %p120, %p121
    %p123 = scmp.ne.s32.totalorder %s112, %s113
    %p124 = scmp.eq.s32.totalorder %s15, 0
    %p125 = por %p123, %p124
    %p126 = scmp.ne.s32.totalorder %s112, %s113
    %p127 = scmp.eq.s32.totalorder %s16, 1
    %p128 = por %p126, %p127
    %p130 = scmp.ne.s32.totalorder %s113, %s129
    %p131 = scmp.eq.s32.totalorder %s16, 0
    %p132 = por %p130, %p131
    %p133 = scmp.le.s32.totalorder 1, %s10
    %p134 = scmp.lt.s32.totalorder %s10, 3
    %p135 = pnand %p133, %p134
    %p136 = pneg %p135
    // Predicated region
    $region9: #{outconv_forward.1} parent=5 // pred_check
      _
    $region10: #{outconv_forward.1} parent=5 // pred_check_branch
      %138 = sbr.rel (%p135) target = $region12
    $region11: #{outconv_forward.1} parent=5 // pred_region
      %s139 = ssub.s32 %s10, 1
      // Predicated region
      $region13: #{outconv_forward.1} parent=11 // pred_check
        %p140 = pneg %p57
      $region14: #{outconv_forward.1} parent=11 // pred_check_branch
        %142 = sbr.rel (%p140) target = $region16
      $region15: #{outconv_forward.1} parent=11 // pred_region
        _
      $region16: #{outconv_forward.1} parent=11 // pred_fallthru
        _
      // Predicated region
      $region17: #{outconv_forward.1} parent=11 // pred_check
        %p143 = pneg %p78
      $region18: #{outconv_forward.1} parent=11 // pred_check_branch
        %145 = sbr.rel (%p143) target = $region20
      $region19: #{outconv_forward.1} parent=11 // pred_region
        _
      $region20: #{outconv_forward.1} parent=11 // pred_fallthru
        _
      // Predicated region
      $region21: #{outconv_forward.1} parent=11 // pred_check
        %p146 = pneg %p99
      $region22: #{outconv_forward.1} parent=11 // pred_check_branch
        %148 = sbr.rel (%p146) target = $region24
      $region23: #{outconv_forward.1} parent=11 // pred_region
        _
      $region24: #{outconv_forward.1} parent=11 // pred_fallthru
        _
    $region12: #{outconv_forward.1} parent=5 // pred_fallthru
      _
    %p149 = scmp.lt.s32.totalorder %s10, 2
    // Predicated region
    $region25: #{outconv_forward.1} parent=5 // pred_check
      %p150 = pneg %p149
    $region26: #{outconv_forward.1} parent=5 // pred_check_branch
      %152 = sbr.rel (%p150) target = $region28
    $region27: #{outconv_forward.1} parent=5 // pred_region
      // Predicated region
      $region29: #{outconv_forward.1} parent=27 // pred_check
        %p153 = pneg %p30
      $region30: #{outconv_forward.1} parent=27 // pred_check_branch
        %155 = sbr.rel (%p153) target = $region32
      $region31: #{outconv_forward.1} parent=27 // pred_region
        %p156 = scmp.lt.s32.totalorder %s10, 1
        %s157 = scalar_select %p156, %s10, 1
        %s158 = smul.addr %s157, 2
        %s159 = smul.addr %s158, 8
        %s160 = scalar_lea.vmem %s0, %s159
      $region32: #{outconv_forward.1} parent=27 // pred_fallthru
        _
    $region28: #{outconv_forward.1} parent=5 // pred_fallthru
      _
    %p161 = scmp.le.s32.totalorder 1, %s10
    %p162 = scmp.lt.s32.totalorder %s10, 3
    %p163 = pnand %p161, %p162
    %p164 = pneg %p163
    // Predicated region
    $region33: #{outconv_forward.1} parent=5 // pred_check
      _
    $region34: #{outconv_forward.1} parent=5 // pred_check_branch
      %166 = sbr.rel (%p163) target = $region36
    $region35: #{outconv_forward.1} parent=5 // pred_region
      %s167 = ssub.s32 %s10, 1
      %p168 = scmp.lt.s32.totalorder %s15, 1
      %s169 = scalar_select %p168, %s15, 1
      %s170 = smul.addr %s169, 2
      %s171 = smul.addr %s170, 8
      %s172 = scalar_lea.vmem %s0, %s171
      %p173 = pneg %p36
      %p174 = pneg %p33
      %p175 = pneg %p57
      %p176 = pneg %p54
      %p177 = pneg %p78
      %p178 = pneg %p75
      %p179 = pneg %p99
      %p180 = pneg %p96
      %p181 = pneg %p125
      %p182 = pneg %p122
      %p183 = scmp.lt.s32.totalorder %s15, 1
      %s184 = scalar_select %p183, %s15, 1
      %s185 = smul.addr %s184, 2
      %s186 = smul.addr %s185, 8
      %s187 = scalar_lea.vmem %s4, %s186
      %p188 = scmp.lt.s32.totalorder %s15, 1
      %s189 = scalar_select %p188, %s15, 1
      %s190 = smul.addr %s189, 2
      %s191 = smul.addr %s190, 8
      %s192 = scalar_lea.vmem %s0, %s191
      %p193 = scmp.lt.s32.totalorder %s15, 1
      %s194 = scalar_select %p193, %s15, 1
      %s195 = smul.addr %s194, 2
      %s196 = smul.addr %s195, 8
      %s197 = scalar_lea.vmem %s4, %s196
      %vm198 = vcmask 516096
      %199 = vst.msk [vmem:[#allocation2] sm:$0x1] %vm198, 0.0
      %200 = vst.msk [vmem:[#allocation2 + $0x11] sm:$0x1] %vm198, 0.0
      %v201 = vld [vmem:[%s192] sm:$0xff]
      %v202 = vld [vmem:[%s192 + $0x8] sm:$0xff]
      %vm203 = vcmask 523264
      %204 = vst.msk [vmem:[#allocation2 + $0x1] sm:$0xff] %vm203, %v201
      %205 = vst.msk [vmem:[#allocation2 + $0x9] sm:$0xff] %vm203, %v202
      %v206 = vld [vmem:[#allocation2] sm:$0xff]
      %v207 = vld [vmem:[#allocation2 + $0x8] sm:$0xff]
      %v208 = vld [vmem:[#allocation2 + $0x1] sm:$0xff]
      %v209 = vld [vmem:[#allocation2 + $0x9] sm:$0xff]
      %v210 = vld [vmem:[#allocation2 + $0x2] sm:$0xff]
      %v211 = vld [vmem:[#allocation2 + $0xa] sm:$0xff]
      %214 = vrot.lane.b32.xlu0 %v208, 64
      %v215 = vpop.permute.xlu0 %214
      %216 = vrot.lane.b32.xlu0 %v209, 64
      %v217 = vpop.permute.xlu0 %216
      %v220 = vsel %vm203, %v206, %v215
      %v221 = vsel %vm203, %v207, %v217
      %v222 = vld [vmem:[%s1] sm:$0xff]
      %v223 = vld [vmem:[%s1 + $0x8] sm:$0xff]
      %v224 = vld [vmem:[%s1 + $0x10] sm:$0xff]
      %v225 = vld [vmem:[%s1 + $0x18] sm:$0xff]
      %v226 = vld [vmem:[%s1 + $0x20] sm:$0xff]
      %v227 = vld [vmem:[%s1 + $0x28] sm:$0xff]
      %v228 = vld [vmem:[%s1 + $0x30] sm:$0xff]
      %v229 = vld [vmem:[%s1 + $0x38] sm:$0xff]
      %v230 = vld [vmem:[%s1 + $0x40] sm:$0xff]
      %v231 = vld [vmem:[%s1 + $0x48] sm:$0xff]
      %v232 = vld [vmem:[%s1 + $0x50] sm:$0xff]
      %v233 = vld [vmem:[%s1 + $0x58] sm:$0xff]
      %v234 = vld [vmem:[%s1 + $0x60] sm:$0xff]
      %v235 = vld [vmem:[%s1 + $0x68] sm:$0xff]
      %v236 = vld [vmem:[%s1 + $0x70] sm:$0xff]
      %v237 = vld [vmem:[%s1 + $0x78] sm:$0xff]
      %v238 = vld [vmem:[%s1 + $0x80] sm:$0xff]
      %v239 = vld [vmem:[%s1 + $0x88] sm:$0xff]
      %v240 = vld [vmem:[%s1 + $0x90] sm:$0xff]
      %v241 = vld [vmem:[%s1 + $0x98] sm:$0xff]
      %v242 = vld [vmem:[%s1 + $0xa0] sm:$0xff]
      %v243 = vld [vmem:[%s1 + $0xa8] sm:$0xff]
      %v244 = vld [vmem:[%s1 + $0xb0] sm:$0xff]
      %v245 = vld [vmem:[%s1 + $0xb8] sm:$0xff]
      %v247 = vsel %vm203, %v210, 0
      %v250 = vsel %vm203, %v211, 0
      %252 = vmatprep.subr.mxu0 0.0
      %253 = vmatpush1.msra.mxu0 %v222
      %254 = vmatprep.subr.mxu0 0.0
      %255 = vmatpush1.msra.mxu0 %v223
      %256 = vmatprep.subr.mxu0 0.0
      %257 = vmatpush1.msra.mxu0 %v224
      %258 = vmatprep.subr.mxu0 0.0
      %259 = vmatpush1.msra.mxu0 %v225
      %260 = vmatprep.subr.mxu0 0.0
      %261 = vmatpush1.msra.mxu0 %v226
      %262 = vmatprep.subr.mxu0 0.0
      %263 = vmatpush1.msra.mxu0 %v227
      %264 = vmatprep.subr.mxu0 0.0
      %265 = vmatpush1.msra.mxu0 %v228
      %266 = vmatprep.subr.mxu0 0.0
      %267 = vmatpush1.msra.mxu0 %v229
      %268 = vmatprep.subr.mxu0 0.0
      %269 = vmatpush1.msra.mxu0 %v230
      %270 = vmatprep.subr.mxu0 0.0
      %271 = vmatpush1.msra.mxu0 %v231
      %272 = vmatprep.subr.mxu0 0.0
      %273 = vmatpush1.msra.mxu0 %v232
      %274 = vmatprep.subr.mxu0 0.0
      %275 = vmatpush1.msra.mxu0 %v233
      %276 = vmatprep.subr.mxu0 0.0
      %277 = vmatpush1.msra.mxu0 %v234
      %278 = vmatprep.subr.mxu0 0.0
      %279 = vmatpush1.msra.mxu0 %v235
      %280 = vmatprep.subr.mxu0 0.0
      %281 = vmatpush1.msra.mxu0 %v236
      %282 = vmatprep.subr.mxu0 0.0
      %283 = vmatpush1.msra.mxu0 %v237
      %284 = vmatprep.subr.mxu0 0.0
      %285 = vmatpush1.msra.mxu0 %v238
      %286 = vmatprep.subr.mxu0 0.0
      %287 = vmatpush1.msra.mxu0 %v239
      %288 = vmatprep.subr.mxu0 0.0
      %289 = vmatpush1.msra.mxu0 %v240
      %290 = vmatprep.subr.mxu0 0.0
      %291 = vmatpush1.msra.mxu0 %v241
      %292 = vmatprep.subr.mxu0 0.0
      %293 = vmatpush1.msra.mxu0 %v242
      %294 = vmatprep.subr.mxu0 0.0
      %295 = vmatpush1.msra.mxu0 %v243
      %296 = vmatprep.subr.mxu0 0.0
      %297 = vmatpush1.msra.mxu0 %v244
      %298 = vmatprep.subr.mxu0 0.0
      %299 = vmatpush1.msra.mxu0 %v245
      %300 = vmatprep.subr.mxu0 0.0
      %301 = vmatpush1.msra.mxu0 0.0
      %302 = vmatprep.subr.mxu0 0.0
      %303 = vmatpush1.msra.mxu0 0.0
      %304 = vmatprep.subr.mxu0 0.0
      %305 = vmatpush1.msra.mxu0 0.0
      %306 = vmatprep.subr.mxu0 0.0
      %307 = vmatpush1.msra.mxu0 0.0
      %308 = vmatprep.subr.mxu0 0.0
      %309 = vmatpush1.msra.mxu0 0.0
      %310 = vmatprep.subr.mxu0 0.0
      %311 = vmatpush1.msra.mxu0 0.0
      %312 = vmatprep.subr.mxu0 0.0
      %313 = vmatpush1.msra.mxu0 0.0
      %314 = vmatprep.subr.mxu0 0.0
      %315 = vmatpush1.msra.mxu0 0.0
      %316 = vmatprep.mubr.f32.mxu0 %v247
      %317 = vmatmul.mubr.f32.gmra.mrb[0].mxu0 %v220
      %v318 = vpop.f32.mrb[0].mxu0
      %v319 = vadd.f32 0.0, %v318
      %v320 = vpop.f32.mrb[0].mxu0
      %321 = vmatprep.mubr.f32.mxu0 %v250
      %322 = vmatmul.mubr.f32.gmra.mrb[0].mxu0 %v221
      %v323 = vpop.f32.mrb[0].mxu0
      %v324 = vadd.f32 0.0, %v323
      %v325 = vpop.f32.mrb[0].mxu0
      %326 = vdwg.mxu0
      %v327 = vld [vmem:[%s2] sm:$0x1]
      %v329 = vlaneseq
      %v330 = vshrl.u32 %v329, 7
      %v331 = vsub.s32 0, %v330
      %v332 = vrot.slane %v327, %v331
      %v334 = vmul.f32 %v319, %v332
      %v335 = vmul.f32 %v324, %v332
      %v336 = vld [vmem:[%s3] sm:$0x1]
      %v338 = vlaneseq
      %v339 = vshrl.u32 %v338, 7
      %v340 = vsub.s32 0, %v339
      %v341 = vrot.slane %v336, %v340
      %v343 = vadd.f32 %v334, %v341
      %v344 = vadd.f32 %v335, %v341
      %v345 = vmax.f32 %v343, 0.0
      %v346 = vmax.f32 %v344, 0.0
      %347 = vst [vmem:[%s197] sm:$0xff] %v345
      %348 = vst [vmem:[%s197 + $0x8] sm:$0xff] %v346
      %p349 = scmp.lt.s32.totalorder %s15, 1
      %s350 = scalar_select %p349, %s15, 1
      %s351 = smul.addr %s350, 2
      %s352 = smul.addr %s351, 8
      %s353 = scalar_lea.vmem %s4, %s352
      // Predicated region
      $region37: #{outconv_forward.1} parent=35 // pred_check
        %p354 = pneg %p122
      $region38: #{outconv_forward.1} parent=35 // pred_check_branch
        %356 = sbr.rel (%p354) target = $region40
      $region39: #{outconv_forward.1} parent=35 // pred_region
        _
      $region40: #{outconv_forward.1} parent=35 // pred_fallthru
        _
    $region36: #{outconv_forward.1} parent=5 // pred_fallthru
      _
    %p357 = scmp.le.s32.totalorder 2, %s10
    // Predicated region
    $region41: #{outconv_forward.1} parent=5 // pred_check
      %p358 = pneg %p357
    $region42: #{outconv_forward.1} parent=5 // pred_check_branch
      %360 = sbr.rel (%p358) target = $region44
    $region43: #{outconv_forward.1} parent=5 // pred_region
      %s361 = ssub.s32 %s10, 2
      // Predicated region
      $region45: #{outconv_forward.1} parent=43 // pred_check
        %p362 = pneg %p128
      $region46: #{outconv_forward.1} parent=43 // pred_check_branch
        %364 = sbr.rel (%p362) target = $region48
      $region47: #{outconv_forward.1} parent=43 // pred_region
        %p365 = scmp.lt.s32.totalorder %s16, 1
        %s366 = scalar_select %p365, %s16, 1
        %s367 = smul.addr %s366, 2
        %s368 = smul.addr %s367, 8
        %s369 = scalar_lea.vmem %s4, %s368
      $region48: #{outconv_forward.1} parent=43 // pred_fallthru
        _
    $region44: #{outconv_forward.1} parent=5 // pred_fallthru
      _
  $region6: #{outconv_forward.1} parent=0 // loop_footer
    %s14 = sadd.s32 1, %s10
  $region7: #{outconv_forward.1} parent=0 // loop_footer_branch
    %9 = sbr.rel target = $region3
  $region8: #{outconv_forward.1} parent=0 // loop_exit
    _

</llo_original>
